<compile_context>
chip_gen: v7x
topology: tpu7x:2x2x1
jax: 0.10.0
libtpu: 0.0.40
codegen_flags: <defaults>
</compile_context>

<pallas_src>
import functools

import jax
import jax.numpy as jnp
import numpy as np
from jax.experimental import pallas as pl
from jax.experimental.pallas import tpu as pltpu


# ----------------------------------------------------------------------------
# Pallas kernel: one grid step == (image n, output row-tile t).
# ----------------------------------------------------------------------------
def _ce_upsample_kernel(preds_ref, ah_ref, awt_ref, tgt_ref, out_ref, tmp_ref):
    # preds_ref: (C, h0, w0)   compute dtype  low-res logits for image n
    # ah_ref:    (TILE_H, h0)  compute dtype  rows of the H interp matrix
    # awt_ref:   (w0, W)       compute dtype  W interp matrix, transposed
    # tgt_ref:   (TILE_H, W)   int8           class ids, -1 == ignore
    # out_ref:   (1, 2)        f32            [sum NLL, valid count] per image
    # tmp_ref:   (C, h0, W)    compute dtype  W-pass result (scratch, per image)
    C = preds_ref.shape[0]
    t = pl.program_id(1)

    @pl.when(t == 0)
    def _():
        # Fresh image: zero the per-image accumulator and run the W-pass once.
        out_ref[...] = jnp.zeros_like(out_ref)
        for c in range(C):
            tmp_ref[c] = jnp.dot(
                preds_ref[c], awt_ref[...],
                preferred_element_type=jnp.float32).astype(tmp_ref.dtype)

    # H-pass for this row tile: per class, (TILE_H, h0) @ (h0, W) on the MXU.
    ah = ah_ref[...]
    logits = [jnp.dot(ah, tmp_ref[c], preferred_element_type=jnp.float32)
              for c in range(C)]                          # C x (TILE_H, W) f32

    tgt = tgt_ref[...].astype(jnp.int32)                  # (TILE_H, W)
    valid = tgt >= 0                                      # -1 == ignore/pad

    # Numerically stable log-sum-exp over classes + target-logit pick.
    m = functools.reduce(jnp.maximum, logits)             # (TILE_H, W)
    s = jnp.zeros_like(m)
    picked = jnp.zeros_like(m)
    for c in range(C):
        s = s + jnp.exp(logits[c] - m)   # TODO(synk): bf16 exp on v6e/v7x only
        picked = picked + jnp.where(tgt == c, logits[c], 0.0)
    lse = m + jnp.log(s)
    per_pix = jnp.where(valid, lse - picked, 0.0)         # NLL per valid pixel

    tile_loss = jnp.sum(per_pix, axis=(0, 1), keepdims=True)              # (1,1)
    tile_cnt = jnp.sum(valid.astype(jnp.float32), axis=(0, 1), keepdims=True)
    lane = jax.lax.broadcasted_iota(jnp.int32, (1, 2), 1)
    out_ref[...] += jnp.where(lane == 0, tile_loss, tile_cnt)             # (1,2)


# ----------------------------------------------------------------------------
# Wrapper
# ----------------------------------------------------------------------------
def _interp_matrix(out_size, in_size):
    """1-D linear interpolation matrix, align_corners=True semantics."""
    scale = (in_size - 1) / (out_size - 1) if out_size > 1 else 0.0
    src = jnp.arange(out_size, dtype=jnp.float32) * scale           # (out,)
    idx = jnp.arange(in_size, dtype=jnp.float32)                    # (in,)
    return jnp.maximum(0.0, 1.0 - jnp.abs(src[:, None] - idx[None, :]))


def criterion_cross_entropy(preds, target, ignore_index=255, *,
                            tile_h=64, compute_dtype=jnp.bfloat16):
    """preds: (N, C, h0, w0) float logits; target: (N, H, W) int class ids."""
    N, C, h0, w0 = (int(s) for s in preds.shape)
    H, W = int(target.shape[1]), int(target.shape[2])

    # Row-tile size: multiple of 32 so the int8 target block is natively tiled.
    tile_h = max(32, 32 * ((int(tile_h) + 31) // 32))
    num_t = -(-H // tile_h)
    H_pad = tile_h * num_t

    # Separable (align_corners=True) bilinear interpolation matrices.
    a_h = _interp_matrix(H, h0)                                      # (H, h0)
    if H_pad > H:  # zero rows -> zero logits; paired targets are 'ignore'.
        a_h = jnp.concatenate(
            [a_h, jnp.zeros((H_pad - H, h0), a_h.dtype)], axis=0)
    a_h = a_h.astype(compute_dtype)
    a_wt = _interp_matrix(W, w0).T.astype(compute_dtype)             # (w0, W)

    preds_c = preds.astype(compute_dtype)

    # int8 targets: ignore_index remapped to -1 (class ids must be < 128).
    tgt8 = jnp.where(target == ignore_index, -1, target).astype(jnp.int8)
    if H_pad > H:
        tgt8 = jnp.concatenate(
            [tgt8, jnp.full((N, H_pad - H, W), -1, jnp.int8)], axis=1)

    out = pl.pallas_call(
        _ce_upsample_kernel,
        out_shape=jax.ShapeDtypeStruct((N, 1, 2), jnp.float32),
        grid_spec=pltpu.PrefetchScalarGridSpec(
            num_scalar_prefetch=0,
            grid=(N, num_t),
            in_specs=[
                pl.BlockSpec((None, C, h0, w0), lambda n, t: (n, 0, 0, 0)),
                pl.BlockSpec((tile_h, h0), lambda n, t: (t, 0)),
                pl.BlockSpec((w0, W), lambda n, t: (0, 0)),
                pl.BlockSpec((None, tile_h, W), lambda n, t: (n, t, 0)),
            ],
            out_specs=pl.BlockSpec((None, 1, 2), lambda n, t: (n, 0, 0)),
            scratch_shapes=[pltpu.VMEM((C, h0, W), compute_dtype)],
        ),
        compiler_params=pltpu.CompilerParams(
            dimension_semantics=("parallel", "arbitrary")),
    )(preds_c, a_h, a_wt, tgt8)

    loss_sum = jnp.sum(out[:, 0, 0])
    cnt = jnp.sum(out[:, 0, 1])
    # reduction='mean' over non-ignored pixels (NaN if every pixel is ignored,
    # matching PyTorch's behaviour).
    return loss_sum / cnt


# ----------------------------------------------------------------------------
# Pure-JAX reference (gather-based bilinear + log_softmax NLL), all in f32.
# ----------------------------------------------------------------------------
def reference_criterion_cross_entropy(preds, target, ignore_index=255):
    N, C, h0, w0 = preds.shape
    H, W = int(target.shape[1]), int(target.shape[2])
    p = preds.astype(jnp.float32)

    ys = jnp.arange(H, dtype=jnp.float32) * ((h0 - 1) / (H - 1) if H > 1 else 0.0)
    xs = jnp.arange(W, dtype=jnp.float32) * ((w0 - 1) / (W - 1) if W > 1 else 0.0)
    y0 = jnp.floor(ys).astype(jnp.int32); y1 = jnp.minimum(y0 + 1, h0 - 1)
    x0 = jnp.floor(xs).astype(jnp.int32); x1 = jnp.minimum(x0 + 1, w0 - 1)
    wy = (ys - y0.astype(jnp.float32))[None, None, :, None]
    wx = (xs - x0.astype(jnp.float32))[None, None, None, :]

    def g(yi, xi):
        return p[:, :, yi, :][:, :, :, xi]

    top = g(y0, x0) * (1.0 - wx) + g(y0, x1) * wx
    bot = g(y1, x0) * (1.0 - wx) + g(y1, x1) * wx
    up = top * (1.0 - wy) + bot * wy                                # (N,C,H,W)

    logp = jax.nn.log_softmax(up, axis=1)
    valid = target != ignore_index
    tgt_safe = jnp.where(valid, target, 0).astype(jnp.int32)
    picked = jnp.take_along_axis(logp, tgt_safe[:, None, :, :], axis=1)[:, 0]
    num = jnp.sum(jnp.where(valid, -picked, 0.0))
    den = jnp.sum(valid.astype(jnp.float32))
    return num / den


if __name__ == "__main__":
    N, C, h0, w0 = 2, 4, 8, 8      # low-res logits over 4 classes
    H, W = 48, 48                  # target resolution (H padded to 64 by tiling)

    key = jax.random.PRNGKey(0)
    kp, kt, ki = jax.random.split(key, 3)
    preds = jax.random.normal(kp, (N, C, h0, w0), dtype=jnp.float32)
    target = jax.random.randint(kt, (N, H, W), 0, C, dtype=jnp.int32)
    # sprinkle ~10% ignore_index pixels to exercise the ignore path
    ignore_mask = jax.random.bernoulli(ki, 0.1, (N, H, W))
    target = jnp.where(ignore_mask, 255, target)

    out = jax.block_until_ready(
        criterion_cross_entropy(preds, target, tile_h=32))   # 2 row tiles + pad
    ref = jax.block_until_ready(reference_criterion_cross_entropy(preds, target))

    # bf16 matmul operands (preds + hat-function interpolation weights) give
    # O(1e-3) relative error on the scalar loss; tolerance reflects that.
    np.testing.assert_allclose(np.asarray(out), np.asarray(ref),
                               rtol=2e-2, atol=2e-3)
    print("KERNEL_OK")
</pallas_src>

<mosaic_0001>
module attributes {stable_mosaic.version = 11 : i64} {
  func.func @_ce_upsample_kernel(%arg0: i32, %arg1: i32, %arg2: memref<1x4x8x8xbf16, #tpu.memory_space<vmem>>, %arg3: memref<32x8xbf16, #tpu.memory_space<vmem>>, %arg4: memref<8x48xbf16, #tpu.memory_space<vmem>>, %arg5: memref<1x32x48xi8, #tpu.memory_space<vmem>>, %arg6: memref<1x1x2xf32, #tpu.memory_space<vmem>>, %arg7: memref<4x8x48xbf16, #tpu.memory_space<vmem>>) attributes {dimension_semantics = [#tpu.dimension_semantics<parallel>, #tpu.dimension_semantics<arbitrary>], iteration_bounds = array<i64: 2, 2>, scalar_prefetch = 0 : i64, scratch_operands = 1 : i64, tpu.core_type = #tpu.core_type<tc>, window_params = [{transform_indices = @transform_0, window_bounds = array<i64: 1, 4, 8, 8>}, {transform_indices = @transform_1, window_bounds = array<i64: 32, 8>}, {pipeline_mode = #tpu.pipeline_mode<synchronous>, transform_indices = @transform_2, window_bounds = array<i64: 8, 48>}, {transform_indices = @transform_3, window_bounds = array<i64: 1, 32, 48>}, {transform_indices = @transform_4, window_bounds = array<i64: 1, 1, 2>}]} {
    %c0_i32 = arith.constant 0 : i32
    %0 = arith.cmpi eq, %arg1, %c0_i32 : i32
    %1 = arith.extui %0 : i1 to i32
    %c0_i32_0 = arith.constant 0 : i32
    %2 = arith.cmpi ne, %1, %c0_i32_0 : i32
    scf.if %2 {
      %cst_35 = arith.constant 0.000000e+00 : f32
      %89 = vector.broadcast %cst_35 : f32 to vector<1x2xf32>
      %c0_36 = arith.constant 0 : index
      %c0_37 = arith.constant 0 : index
      %c0_38 = arith.constant 0 : index
      %90 = vector.load %arg6[%c0_36, %c0_37, %c0_38] : memref<1x1x2xf32, #tpu.memory_space<vmem>>, vector<1x1x2xf32>
      %91 = vector.shape_cast %90 : vector<1x1x2xf32> to vector<1x2xf32>
      %92 = vector.shape_cast %89 : vector<1x2xf32> to vector<1x1x2xf32>
      tpu.vector_store %arg6[%c0_36, %c0_37, %c0_38], %92 {strides = array<i32>} : memref<1x1x2xf32, #tpu.memory_space<vmem>>, vector<1x1x2xf32>,
      %c0_39 = arith.constant 0 : index
      %c0_40 = arith.constant 0 : index
      %c0_41 = arith.constant 0 : index
      %c0_42 = arith.constant 0 : index
      %93 = vector.load %arg2[%c0_39, %c0_40, %c0_41, %c0_42] : memref<1x4x8x8xbf16, #tpu.memory_space<vmem>>, vector<1x1x8x8xbf16>
      %94 = vector.shape_cast %93 : vector<1x1x8x8xbf16> to vector<8x8xbf16>
      %c0_43 = arith.constant 0 : index
      %c0_44 = arith.constant 0 : index
      %95 = vector.load %arg4[%c0_43, %c0_44] : memref<8x48xbf16, #tpu.memory_space<vmem>>, vector<8x48xbf16>
      %cst_45 = arith.constant dense<0.000000e+00> : vector<8x48xf32>
      %96 = tpu.matmul %94, %95, %cst_45 {dimension_numbers = #tpu.dot_dimension_numbers<[1], [0], [0], [1], [0, 0, 1, 1], [], []>} : vector<8x8xbf16>, vector<8x48xbf16>, vector<8x48xf32> -> vector<8x48xf32>
      %97 = arith.truncf %96 : vector<8x48xf32> to vector<8x48xbf16>
      %c0_46 = arith.constant 0 : index
      %c0_47 = arith.constant 0 : index
      %c0_48 = arith.constant 0 : index
      %98 = vector.load %arg7[%c0_46, %c0_47, %c0_48] : memref<4x8x48xbf16, #tpu.memory_space<vmem>>, vector<1x8x48xbf16>
      %99 = vector.shape_cast %98 : vector<1x8x48xbf16> to vector<8x48xbf16>
      %100 = vector.shape_cast %97 : vector<8x48xbf16> to vector<1x8x48xbf16>
      tpu.vector_store %arg7[%c0_46, %c0_47, %c0_48], %100 {strides = array<i32>} : memref<4x8x48xbf16, #tpu.memory_space<vmem>>, vector<1x8x48xbf16>,
      %c0_49 = arith.constant 0 : index
      %c1_50 = arith.constant 1 : index
      %c0_51 = arith.constant 0 : index
      %c0_52 = arith.constant 0 : index
      %101 = vector.load %arg2[%c0_49, %c1_50, %c0_51, %c0_52] : memref<1x4x8x8xbf16, #tpu.memory_space<vmem>>, vector<1x1x8x8xbf16>
      %102 = vector.shape_cast %101 : vector<1x1x8x8xbf16> to vector<8x8xbf16>
      %c0_53 = arith.constant 0 : index
      %c0_54 = arith.constant 0 : index
      %103 = vector.load %arg4[%c0_53, %c0_54] : memref<8x48xbf16, #tpu.memory_space<vmem>>, vector<8x48xbf16>
      %cst_55 = arith.constant dense<0.000000e+00> : vector<8x48xf32>
      %104 = tpu.matmul %102, %103, %cst_55 {dimension_numbers = #tpu.dot_dimension_numbers<[1], [0], [0], [1], [0, 0, 1, 1], [], []>} : vector<8x8xbf16>, vector<8x48xbf16>, vector<8x48xf32> -> vector<8x48xf32>
      %105 = arith.truncf %104 : vector<8x48xf32> to vector<8x48xbf16>
      %c1_56 = arith.constant 1 : index
      %c0_57 = arith.constant 0 : index
      %c0_58 = arith.constant 0 : index
      %106 = vector.load %arg7[%c1_56, %c0_57, %c0_58] : memref<4x8x48xbf16, #tpu.memory_space<vmem>>, vector<1x8x48xbf16>
      %107 = vector.shape_cast %106 : vector<1x8x48xbf16> to vector<8x48xbf16>
      %108 = vector.shape_cast %105 : vector<8x48xbf16> to vector<1x8x48xbf16>
      tpu.vector_store %arg7[%c1_56, %c0_57, %c0_58], %108 {strides = array<i32>} : memref<4x8x48xbf16, #tpu.memory_space<vmem>>, vector<1x8x48xbf16>,
      %c0_59 = arith.constant 0 : index
      %c2_60 = arith.constant 2 : index
      %c0_61 = arith.constant 0 : index
      %c0_62 = arith.constant 0 : index
      %109 = vector.load %arg2[%c0_59, %c2_60, %c0_61, %c0_62] : memref<1x4x8x8xbf16, #tpu.memory_space<vmem>>, vector<1x1x8x8xbf16>
      %110 = vector.shape_cast %109 : vector<1x1x8x8xbf16> to vector<8x8xbf16>
      %c0_63 = arith.constant 0 : index
      %c0_64 = arith.constant 0 : index
      %111 = vector.load %arg4[%c0_63, %c0_64] : memref<8x48xbf16, #tpu.memory_space<vmem>>, vector<8x48xbf16>
      %cst_65 = arith.constant dense<0.000000e+00> : vector<8x48xf32>
      %112 = tpu.matmul %110, %111, %cst_65 {dimension_numbers = #tpu.dot_dimension_numbers<[1], [0], [0], [1], [0, 0, 1, 1], [], []>} : vector<8x8xbf16>, vector<8x48xbf16>, vector<8x48xf32> -> vector<8x48xf32>
      %113 = arith.truncf %112 : vector<8x48xf32> to vector<8x48xbf16>
      %c2_66 = arith.constant 2 : index
      %c0_67 = arith.constant 0 : index
      %c0_68 = arith.constant 0 : index
      %114 = vector.load %arg7[%c2_66, %c0_67, %c0_68] : memref<4x8x48xbf16, #tpu.memory_space<vmem>>, vector<1x8x48xbf16>
      %115 = vector.shape_cast %114 : vector<1x8x48xbf16> to vector<8x48xbf16>
      %116 = vector.shape_cast %113 : vector<8x48xbf16> to vector<1x8x48xbf16>
      tpu.vector_store %arg7[%c2_66, %c0_67, %c0_68], %116 {strides = array<i32>} : memref<4x8x48xbf16, #tpu.memory_space<vmem>>, vector<1x8x48xbf16>,
      %c0_69 = arith.constant 0 : index
      %c3_70 = arith.constant 3 : index
      %c0_71 = arith.constant 0 : index
      %c0_72 = arith.constant 0 : index
      %117 = vector.load %arg2[%c0_69, %c3_70, %c0_71, %c0_72] : memref<1x4x8x8xbf16, #tpu.memory_space<vmem>>, vector<1x1x8x8xbf16>
      %118 = vector.shape_cast %117 : vector<1x1x8x8xbf16> to vector<8x8xbf16>
      %c0_73 = arith.constant 0 : index
      %c0_74 = arith.constant 0 : index
      %119 = vector.load %arg4[%c0_73, %c0_74] : memref<8x48xbf16, #tpu.memory_space<vmem>>, vector<8x48xbf16>
      %cst_75 = arith.constant dense<0.000000e+00> : vector<8x48xf32>
      %120 = tpu.matmul %118, %119, %cst_75 {dimension_numbers = #tpu.dot_dimension_numbers<[1], [0], [0], [1], [0, 0, 1, 1], [], []>} : vector<8x8xbf16>, vector<8x48xbf16>, vector<8x48xf32> -> vector<8x48xf32>
      %121 = arith.truncf %120 : vector<8x48xf32> to vector<8x48xbf16>
      %c3_76 = arith.constant 3 : index
      %c0_77 = arith.constant 0 : index
      %c0_78 = arith.constant 0 : index
      %122 = vector.load %arg7[%c3_76, %c0_77, %c0_78] : memref<4x8x48xbf16, #tpu.memory_space<vmem>>, vector<1x8x48xbf16>
      %123 = vector.shape_cast %122 : vector<1x8x48xbf16> to vector<8x48xbf16>
      %124 = vector.shape_cast %121 : vector<8x48xbf16> to vector<1x8x48xbf16>
      tpu.vector_store %arg7[%c3_76, %c0_77, %c0_78], %124 {strides = array<i32>} : memref<4x8x48xbf16, #tpu.memory_space<vmem>>, vector<1x8x48xbf16>,
    } else {
    }
    %c0 = arith.constant 0 : index
    %c0_1 = arith.constant 0 : index
    %3 = vector.load %arg3[%c0, %c0_1] : memref<32x8xbf16, #tpu.memory_space<vmem>>, vector<32x8xbf16>
    %c0_2 = arith.constant 0 : index
    %c0_3 = arith.constant 0 : index
    %c0_4 = arith.constant 0 : index
    %4 = vector.load %arg7[%c0_2, %c0_3, %c0_4] : memref<4x8x48xbf16, #tpu.memory_space<vmem>>, vector<1x8x48xbf16>
    %5 = vector.shape_cast %4 : vector<1x8x48xbf16> to vector<8x48xbf16>
    %cst = arith.constant dense<0.000000e+00> : vector<32x48xf32>
    %6 = tpu.matmul %3, %5, %cst {dimension_numbers = #tpu.dot_dimension_numbers<[1], [0], [0], [1], [0, 0, 1, 1], [], []>} : vector<32x8xbf16>, vector<8x48xbf16>, vector<32x48xf32> -> vector<32x48xf32>
    %c1 = arith.constant 1 : index
    %c0_5 = arith.constant 0 : index
    %c0_6 = arith.constant 0 : index
    %7 = vector.load %arg7[%c1, %c0_5, %c0_6] : memref<4x8x48xbf16, #tpu.memory_space<vmem>>, vector<1x8x48xbf16>
    %8 = vector.shape_cast %7 : vector<1x8x48xbf16> to vector<8x48xbf16>
    %cst_7 = arith.constant dense<0.000000e+00> : vector<32x48xf32>
    %9 = tpu.matmul %3, %8, %cst_7 {dimension_numbers = #tpu.dot_dimension_numbers<[1], [0], [0], [1], [0, 0, 1, 1], [], []>} : vector<32x8xbf16>, vector<8x48xbf16>, vector<32x48xf32> -> vector<32x48xf32>
    %c2 = arith.constant 2 : index
    %c0_8 = arith.constant 0 : index
    %c0_9 = arith.constant 0 : index
    %10 = vector.load %arg7[%c2, %c0_8, %c0_9] : memref<4x8x48xbf16, #tpu.memory_space<vmem>>, vector<1x8x48xbf16>
    %11 = vector.shape_cast %10 : vector<1x8x48xbf16> to vector<8x48xbf16>
    %cst_10 = arith.constant dense<0.000000e+00> : vector<32x48xf32>
    %12 = tpu.matmul %3, %11, %cst_10 {dimension_numbers = #tpu.dot_dimension_numbers<[1], [0], [0], [1], [0, 0, 1, 1], [], []>} : vector<32x8xbf16>, vector<8x48xbf16>, vector<32x48xf32> -> vector<32x48xf32>
    %c3 = arith.constant 3 : index
    %c0_11 = arith.constant 0 : index
    %c0_12 = arith.constant 0 : index
    %13 = vector.load %arg7[%c3, %c0_11, %c0_12] : memref<4x8x48xbf16, #tpu.memory_space<vmem>>, vector<1x8x48xbf16>
    %14 = vector.shape_cast %13 : vector<1x8x48xbf16> to vector<8x48xbf16>
    %cst_13 = arith.constant dense<0.000000e+00> : vector<32x48xf32>
    %15 = tpu.matmul %3, %14, %cst_13 {dimension_numbers = #tpu.dot_dimension_numbers<[1], [0], [0], [1], [0, 0, 1, 1], [], []>} : vector<32x8xbf16>, vector<8x48xbf16>, vector<32x48xf32> -> vector<32x48xf32>
    %c0_14 = arith.constant 0 : index
    %c0_15 = arith.constant 0 : index
    %c0_16 = arith.constant 0 : index
    %16 = vector.load %arg5[%c0_14, %c0_15, %c0_16] : memref<1x32x48xi8, #tpu.memory_space<vmem>>, vector<1x32x48xi8>
    %17 = vector.shape_cast %16 : vector<1x32x48xi8> to vector<32x48xi8>
    %18 = arith.extsi %17 : vector<32x48xi8> to vector<32x48xi32>
    %c0_i32_17 = arith.constant 0 : i32
    %19 = vector.broadcast %c0_i32_17 : i32 to vector<32x48xi32>
    %20 = arith.cmpi sge, %18, %19 : vector<32x48xi32>
    %21 = arith.maximumf %6, %9 : vector<32x48xf32>
    %22 = arith.maximumf %21, %12 : vector<32x48xf32>
    %23 = arith.maximumf %22, %15 : vector<32x48xf32>
    %cst_18 = arith.constant 0.000000e+00 : f32
    %24 = vector.broadcast %cst_18 : f32 to vector<32x48xf32>
    %cst_19 = arith.constant 0.000000e+00 : f32
    %25 = vector.broadcast %cst_19 : f32 to vector<32x48xf32>
    %26 = arith.subf %6, %23 : vector<32x48xf32>
    %27 = math.exp %26 : vector<32x48xf32>
    %28 = arith.addf %24, %27 : vector<32x48xf32>
    %c0_i32_20 = arith.constant 0 : i32
    %29 = vector.broadcast %c0_i32_20 : i32 to vector<32x48xi32>
    %30 = arith.cmpi eq, %18, %29 : vector<32x48xi32>
    %cst_21 = arith.constant 0.000000e+00 : f32
    %31 = vector.broadcast %cst_21 : f32 to vector<32x48xf32>
    %32 = arith.select %30, %6, %31 : vector<32x48xi1>, vector<32x48xf32>
    %33 = arith.addf %25, %32 : vector<32x48xf32>
    %34 = arith.subf %9, %23 : vector<32x48xf32>
    %35 = math.exp %34 : vector<32x48xf32>
    %36 = arith.addf %28, %35 : vector<32x48xf32>
    %c1_i32 = arith.constant 1 : i32
    %37 = vector.broadcast %c1_i32 : i32 to vector<32x48xi32>
    %38 = arith.cmpi eq, %18, %37 : vector<32x48xi32>
    %cst_22 = arith.constant 0.000000e+00 : f32
    %39 = vector.broadcast %cst_22 : f32 to vector<32x48xf32>
    %40 = arith.select %38, %9, %39 : vector<32x48xi1>, vector<32x48xf32>
    %41 = arith.addf %33, %40 : vector<32x48xf32>
    %42 = arith.subf %12, %23 : vector<32x48xf32>
    %43 = math.exp %42 : vector<32x48xf32>
    %44 = arith.addf %36, %43 : vector<32x48xf32>
    %c2_i32 = arith.constant 2 : i32
    %45 = vector.broadcast %c2_i32 : i32 to vector<32x48xi32>
    %46 = arith.cmpi eq, %18, %45 : vector<32x48xi32>
    %cst_23 = arith.constant 0.000000e+00 : f32
    %47 = vector.broadcast %cst_23 : f32 to vector<32x48xf32>
    %48 = arith.select %46, %12, %47 : vector<32x48xi1>, vector<32x48xf32>
    %49 = arith.addf %41, %48 : vector<32x48xf32>
    %50 = arith.subf %15, %23 : vector<32x48xf32>
    %51 = math.exp %50 : vector<32x48xf32>
    %52 = arith.addf %44, %51 : vector<32x48xf32>
    %c3_i32 = arith.constant 3 : i32
    %53 = vector.broadcast %c3_i32 : i32 to vector<32x48xi32>
    %54 = arith.cmpi eq, %18, %53 : vector<32x48xi32>
    %cst_24 = arith.constant 0.000000e+00 : f32
    %55 = vector.broadcast %cst_24 : f32 to vector<32x48xf32>
    %56 = arith.select %54, %15, %55 : vector<32x48xi1>, vector<32x48xf32>
    %57 = arith.addf %49, %56 : vector<32x48xf32>
    %58 = math.log %52 : vector<32x48xf32>
    %59 = arith.addf %23, %58 : vector<32x48xf32>
    %60 = arith.subf %59, %57 : vector<32x48xf32>
    %cst_25 = arith.constant 0.000000e+00 : f32
    %61 = vector.broadcast %cst_25 : f32 to vector<32x48xf32>
    %62 = arith.select %20, %60, %61 : vector<32x48xi1>, vector<32x48xf32>
    %63 = vector.shape_cast %62 : vector<32x48xf32> to vector<1x32x48xf32>
    %cst_26 = arith.constant dense<0.000000e+00> : vector<1xf32>
    %64 = vector.multi_reduction <add>, %63, %cst_26 [1, 2] : vector<1x32x48xf32> to vector<1xf32>
    %65 = vector.shape_cast %64 : vector<1xf32> to vector<1x1x1xf32>
    %66 = vector.extract %65[0, 0, 0] : f32 from vector<1x1x1xf32>
    %67 = vector.broadcast %66 : f32 to vector<1x1xf32>
    %68 = arith.extui %20 : vector<32x48xi1> to vector<32x48xi32>
    %69 = arith.sitofp %68 : vector<32x48xi32> to vector<32x48xf32>
    %70 = vector.shape_cast %69 : vector<32x48xf32> to vector<1x32x48xf32>
    %cst_27 = arith.constant dense<0.000000e+00> : vector<1xf32>
    %71 = vector.multi_reduction <add>, %70, %cst_27 [1, 2] : vector<1x32x48xf32> to vector<1xf32>
    %72 = vector.shape_cast %71 : vector<1xf32> to vector<1x1x1xf32>
    %73 = vector.extract %72[0, 0, 0] : f32 from vector<1x1x1xf32>
    %74 = vector.broadcast %73 : f32 to vector<1x1xf32>
    %75 = tpu.iota {dimensions = array<i32: 1>} : vector<1x2xi32>
    %c0_28 = arith.constant 0 : index
    %c0_29 = arith.constant 0 : index
    %c0_30 = arith.constant 0 : index
    %76 = vector.load %arg6[%c0_28, %c0_29, %c0_30] : memref<1x1x2xf32, #tpu.memory_space<vmem>>, vector<1x1x2xf32>
    %77 = vector.shape_cast %76 : vector<1x1x2xf32> to vector<1x2xf32>
    %c0_i32_31 = arith.constant 0 : i32
    %78 = vector.broadcast %c0_i32_31 : i32 to vector<1x2xi32>
    %79 = arith.cmpi eq, %75, %78 : vector<1x2xi32>
    %80 = vector.shape_cast %67 : vector<1x1xf32> to vector<1x1xf32>
    %81 = vector.broadcast %80 : vector<1x1xf32> to vector<1x2xf32>
    %82 = vector.shape_cast %74 : vector<1x1xf32> to vector<1x1xf32>
    %83 = vector.broadcast %82 : vector<1x1xf32> to vector<1x2xf32>
    %84 = arith.select %79, %81, %83 : vector<1x2xi1>, vector<1x2xf32>
    %85 = arith.addf %77, %84 : vector<1x2xf32>
    %c0_32 = arith.constant 0 : index
    %c0_33 = arith.constant 0 : index
    %c0_34 = arith.constant 0 : index
    %86 = vector.load %arg6[%c0_32, %c0_33, %c0_34] : memref<1x1x2xf32, #tpu.memory_space<vmem>>, vector<1x1x2xf32>
    %87 = vector.shape_cast %86 : vector<1x1x2xf32> to vector<1x2xf32>
    %88 = vector.shape_cast %85 : vector<1x2xf32> to vector<1x1x2xf32>
    tpu.vector_store %arg6[%c0_32, %c0_33, %c0_34], %88 {strides = array<i32>} : memref<1x1x2xf32, #tpu.memory_space<vmem>>, vector<1x1x2xf32>,
    return
  }
  func.func @transform_0(%arg0: i32, %arg1: i32) -> (i32, i32, i32, i32) {
    %c0_i32 = arith.constant 0 : i32
    %c0_i32_0 = arith.constant 0 : i32
    %c0_i32_1 = arith.constant 0 : i32
    %c0_i32_2 = arith.constant 0 : i32
    return %arg0, %c0_i32, %c0_i32_0, %c0_i32_1 : i32, i32, i32, i32
  }
  func.func @transform_1(%arg0: i32, %arg1: i32) -> (i32, i32) {
    %c0_i32 = arith.constant 0 : i32
    %c0_i32_0 = arith.constant 0 : i32
    return %arg1, %c0_i32 : i32, i32
  }
  func.func @transform_2(%arg0: i32, %arg1: i32) -> (i32, i32) {
    %c0_i32 = arith.constant 0 : i32
    %c0_i32_0 = arith.constant 0 : i32
    %c0_i32_1 = arith.constant 0 : i32
    return %c0_i32, %c0_i32_0 : i32, i32
  }
  func.func @transform_3(%arg0: i32, %arg1: i32) -> (i32, i32, i32) {
    %c0_i32 = arith.constant 0 : i32
    %c0_i32_0 = arith.constant 0 : i32
    return %arg0, %arg1, %c0_i32 : i32, i32, i32
  }
  func.func @transform_4(%arg0: i32, %arg1: i32) -> (i32, i32, i32) {
    %c0_i32 = arith.constant 0 : i32
    %c0_i32_0 = arith.constant 0 : i32
    %c0_i32_1 = arith.constant 0 : i32
    return %arg0, %c0_i32, %c0_i32_0 : i32, i32, i32
  }
}

</mosaic_0001>

<llo_original>
// kernel: tpu_custom_call.1
$region0: #{tpu_custom_call.1}
  #allocation0 [shape = 'u32[]', space=smem, size = 0x4, offset = 0x4, fixed_abs, tag = 'smem constant byte address 0x4 - core index']
  #allocation1 [shape = 'u32[144,128]{1,0:T(1,128)}', space=vmem, size = 0x12000, scoped, tag = 'internal scratch']
  #allocation2 [shape = 'bf16[4,8,48]{2,1,0:T(8,128)(2,1)}', space=vmem, size = 0x2000, scoped, tag = 'scratch operand']
  %s0 = inlined_call_operand.vmem [shape: bf16[2,4,8,8], index: 0, kind: input, shape index: {}]
  %s1 = inlined_call_operand.vmem [shape: bf16[64,8], index: 1, kind: input, shape index: {}]
  %s2 = inlined_call_operand.vmem [shape: bf16[8,48], index: 2, kind: input, shape index: {}]
  %s3 = inlined_call_operand.vmem [shape: s8[2,64,48], index: 3, kind: input, shape index: {}]
  %s4 = inlined_call_operand.hbm [shape: f32[2,1,2], index: 4, kind: output, shape index: {}]
  %s5 = sld [smem:[#allocation0]]
  $region53: #{tpu_custom_call.1} parent=0
    _
  %s7 = ssub.s32 1, %s5
  %s8 = scalar_select 0, %s7, %s5
  $region1: #{tpu_custom_call.1} parent=0
    #allocation3 [shape = 'u8[1024]{0}', space=vmem, size = 0x400, scoped, tag = 'output window, operand 0']
    #allocation4 [shape = 's32[2]{0}', space=sflag, size = 0x8, scoped, tag = 'scoped memory for tpu_custom_call.1']
    %9 = vsyncpa [#allocation4], 0
    %s10 = scalar_lea.sflag [#allocation4], 1
    %11 = vsyncpa %s10, 0
    loop: start=0, step=1, limit=6
    $region2: #{tpu_custom_call.1} parent=1 // loop_pre_header
      _
    $region3: #{tpu_custom_call.1} parent=1 // loop_header
      %s13 = sphi 0, %s17
      %p14 = scmp.ge.s32.totalorder %s13, 6
      %s20 = sphi 0, %s32
      %s21 = sphi 0, %s28
      %s22 = sphi 0, %s20
      %s23 = sphi 0, %s21
      %s24 = sphi 0, %s22
      %s25 = sphi 0, %s23
      %s35 = sphi 0, %s37
      %s38 = sphi 0, %s35
      %s39 = sphi 0, %s38
      %s55 = sphi 0, %s39
      %s61 = sphi 0, %s63
      %s64 = sphi 0, %s61
      %s65 = sphi 0, %s64
      %s81 = sphi 0, %s65
      %s85 = sphi 0, %s85
      %s87 = sphi 0, %s85
      %s88 = sphi 0, %s87
      %s102 = sphi 0, %s88
      %s110 = sphi 0, %s112
      %s113 = sphi 0, %s110
      %s114 = sphi 0, %s113
      %s130 = sphi 0, %s114
      %s136 = sphi 0, %s138
      %s139 = sphi 0, %s136
      %s140 = sphi 0, %s139
      %s156 = sphi 0, %s140
    $region4: #{tpu_custom_call.1} parent=1 // loop_header_branch
      %16 = sbr.rel (%p14) target = $region8
    $region5: #{tpu_custom_call.1} parent=1 // loop_body
      %s18 = ssub.s32 %s13, 1
      %s19 = ssub.s32 %s13, 2
      %s26 = sadd.s32 1, %s21
      %p27 = scmp.ge.s32.totalorder %s26, 2
      %s28 = scalar_select %p27, 0, %s26
      %s29 = sadd.s32 1, %s20
      %s30 = scalar_select %p27, %s29, %s20
      %p31 = scmp.ge.s32.totalorder %s30, 2
      %s32 = scalar_select %p31, 0, %s30
      %s33 = ssub.s32 %s20, %s32
      %p34 = scmp.eq.s32.totalorder %s33, 0
      %s36 = sadd.s32 %s35, 1
      %s37 = scalar_select %p34, %s35, %s36
      %p40 = pneg %p34
      %p41 = scmp.eq.s32.totalorder %s13, 3
      %p42 = por %p40, %p41
      %p43 = scmp.ne.s32.totalorder %s35, %s38
      %p44 = scmp.eq.s32.totalorder %s13, 0
      %p45 = por %p43, %p44
      %p46 = scmp.ne.s32.totalorder %s35, %s38
      %p47 = scmp.eq.s32.totalorder %s18, 3
      %p48 = por %p46, %p47
      %p49 = scmp.ne.s32.totalorder %s38, %s39
      %p50 = scmp.eq.s32.totalorder %s18, 0
      %p51 = por %p49, %p50
      %p52 = scmp.ne.s32.totalorder %s38, %s39
      %p53 = scmp.eq.s32.totalorder %s19, 3
      %p54 = por %p52, %p53
      %p56 = scmp.ne.s32.totalorder %s39, %s55
      %p57 = scmp.eq.s32.totalorder %s19, 0
      %p58 = por %p56, %p57
      %s59 = ssub.s32 %s21, %s28
      %p60 = scmp.eq.s32.totalorder %s59, 0
      %s62 = sadd.s32 %s61, 1
      %s63 = scalar_select %p60, %s61, %s62
      %p66 = pneg %p60
      %p67 = scmp.eq.s32.totalorder %s13, 3
      %p68 = por %p66, %p67
      %p69 = scmp.ne.s32.totalorder %s61, %s64
      %p70 = scmp.eq.s32.totalorder %s13, 0
      %p71 = por %p69, %p70
      %p72 = scmp.ne.s32.totalorder %s61, %s64
      %p73 = scmp.eq.s32.totalorder %s18, 3
      %p74 = por %p72, %p73
      %p75 = scmp.ne.s32.totalorder %s64, %s65
      %p76 = scmp.eq.s32.totalorder %s18, 0
      %p77 = por %p75, %p76
      %p78 = scmp.ne.s32.totalorder %s64, %s65
      %p79 = scmp.eq.s32.totalorder %s19, 3
      %p80 = por %p78, %p79
      %p82 = scmp.ne.s32.totalorder %s65, %s81
      %p83 = scmp.eq.s32.totalorder %s19, 0
      %p84 = por %p82, %p83
      %s86 = sadd.s32 %s85, 1
      %p89 = scmp.eq.s32.totalorder %s13, 3
      %p90 = scmp.ne.s32.totalorder %s85, %s87
      %p91 = scmp.eq.s32.totalorder %s13, 0
      %p92 = por %p90, %p91
      %p93 = scmp.ne.s32.totalorder %s85, %s87
      %p94 = scmp.eq.s32.totalorder %s18, 3
      %p95 = por %p93, %p94
      %p96 = scmp.ne.s32.totalorder %s87, %s88
      %p97 = scmp.eq.s32.totalorder %s18, 0
      %p98 = por %p96, %p97
      %p99 = scmp.ne.s32.totalorder %s87, %s88
      %p100 = scmp.eq.s32.totalorder %s19, 3
      %p101 = por %p99, %p100
      %p103 = scmp.ne.s32.totalorder %s88, %s102
      %p104 = scmp.eq.s32.totalorder %s19, 0
      %p105 = por %p103, %p104
      %s106 = ssub.s32 %s20, %s32
      %s107 = ssub.s32 %s21, %s28
      %s108 = sor.u32 %s106, %s107
      %p109 = scmp.eq.s32.totalorder %s108, 0
      %s111 = sadd.s32 %s110, 1
      %s112 = scalar_select %p109, %s110, %s111
      %p115 = pneg %p109
      %p116 = scmp.eq.s32.totalorder %s13, 3
      %p117 = por %p115, %p116
      %p118 = scmp.ne.s32.totalorder %s110, %s113
      %p119 = scmp.eq.s32.totalorder %s13, 0
      %p120 = por %p118, %p119
      %p121 = scmp.ne.s32.totalorder %s110, %s113
      %p122 = scmp.eq.s32.totalorder %s18, 3
      %p123 = por %p121, %p122
      %p124 = scmp.ne.s32.totalorder %s113, %s114
      %p125 = scmp.eq.s32.totalorder %s18, 0
      %p126 = por %p124, %p125
      %p127 = scmp.ne.s32.totalorder %s113, %s114
      %p128 = scmp.eq.s32.totalorder %s19, 3
      %p129 = por %p127, %p128
      %p131 = scmp.ne.s32.totalorder %s114, %s130
      %p132 = scmp.eq.s32.totalorder %s19, 0
      %p133 = por %p131, %p132
      %s134 = ssub.s32 %s20, %s32
      %p135 = scmp.eq.s32.totalorder %s134, 0
      %s137 = sadd.s32 %s136, 1
      %s138 = scalar_select %p135, %s136, %s137
      %p141 = pneg %p135
      %p142 = scmp.eq.s32.totalorder %s13, 3
      %p143 = por %p141, %p142
      %p144 = scmp.ne.s32.totalorder %s136, %s139
      %p145 = scmp.eq.s32.totalorder %s13, 0
      %p146 = por %p144, %p145
      %p147 = scmp.ne.s32.totalorder %s136, %s139
      %p148 = scmp.eq.s32.totalorder %s18, 3
      %p149 = por %p147, %p148
      %p150 = scmp.ne.s32.totalorder %s139, %s140
      %p151 = scmp.eq.s32.totalorder %s18, 0
      %p152 = por %p150, %p151
      %p153 = scmp.ne.s32.totalorder %s139, %s140
      %p154 = scmp.eq.s32.totalorder %s19, 3
      %p155 = por %p153, %p154
      %p157 = scmp.ne.s32.totalorder %s140, %s156
      %p158 = scmp.eq.s32.totalorder %s19, 0
      %p159 = por %p157, %p158
      %p160 = scmp.le.s32.totalorder 1, %s13
      %p161 = scmp.lt.s32.totalorder %s13, 5
      %p162 = pnand %p160, %p161
      %p163 = pneg %p162
      // Predicated region
      $region9: #{tpu_custom_call.1} parent=5 // pred_check
        _
      $region10: #{tpu_custom_call.1} parent=5 // pred_check_branch
        %165 = sbr.rel (%p162) target = $region12
      $region11: #{tpu_custom_call.1} parent=5 // pred_region
        %s166 = ssub.s32 %s13, 1
        // Predicated region
        $region13: #{tpu_custom_call.1} parent=11 // pred_check
          %p167 = pneg %p98
        $region14: #{tpu_custom_call.1} parent=11 // pred_check_branch
          %169 = sbr.rel (%p167) target = $region16
        $region15: #{tpu_custom_call.1} parent=11 // pred_region
          _
        $region16: #{tpu_custom_call.1} parent=11 // pred_fallthru
          _
      $region12: #{tpu_custom_call.1} parent=5 // pred_fallthru
        _
      %p170 = scmp.lt.s32.totalorder %s13, 4
      // Predicated region
      $region17: #{tpu_custom_call.1} parent=5 // pred_check
        %p171 = pneg %p170
      $region18: #{tpu_custom_call.1} parent=5 // pred_check_branch
        %173 = sbr.rel (%p171) target = $region20
      $region19: #{tpu_custom_call.1} parent=5 // pred_region
        // Predicated region
        $region21: #{tpu_custom_call.1} parent=19 // pred_check
          %p174 = pneg %p45
        $region22: #{tpu_custom_call.1} parent=19 // pred_check_branch
          %176 = sbr.rel (%p174) target = $region24
        $region23: #{tpu_custom_call.1} parent=19 // pred_region
          %p177 = scmp.lt.s32.totalorder %s20, 1
          %s178 = scalar_select %p177, %s20, 1
          %s179 = smul.addr %s178, 4
          %s180 = smul.addr %s179, 4
          %s181 = scalar_lea.vmem %s0, %s180
        $region24: #{tpu_custom_call.1} parent=19 // pred_fallthru
          _
        // Predicated region
        $region25: #{tpu_custom_call.1} parent=19 // pred_check
          %p182 = pneg %p71
        $region26: #{tpu_custom_call.1} parent=19 // pred_check_branch
          %184 = sbr.rel (%p182) target = $region28
        $region27: #{tpu_custom_call.1} parent=19 // pred_region
          %s185 = smul.u32 4, %s21
          %p186 = scmp.lt.s32.totalorder %s185, 7
          %s187 = scalar_select %p186, %s185, 7
          %s188 = smul.addr %s187, 4
          %s189 = scalar_lea.vmem %s1, %s188
          %s190 = smul.u32 4, %s21
        $region28: #{tpu_custom_call.1} parent=19 // pred_fallthru
          _
        // Predicated region
        $region29: #{tpu_custom_call.1} parent=19 // pred_check
          %p191 = pneg %p120
        $region30: #{tpu_custom_call.1} parent=19 // pred_check_branch
          %193 = sbr.rel (%p191) target = $region32
        $region31: #{tpu_custom_call.1} parent=19 // pred_region
          %p194 = scmp.lt.s32.totalorder %s20, 1
          %s195 = scalar_select %p194, %s20, 1
          %p196 = scmp.lt.s32.totalorder %s21, 1
          %s197 = scalar_select %p196, %s21, 1
          %s198 = smul.addr %s195, 2
          %s199 = sadd.s32 %s197, %s198
          %s200 = smul.addr %s199, 8
          %s201 = scalar_lea.vmem %s3, %s200
        $region32: #{tpu_custom_call.1} parent=19 // pred_fallthru
          _
      $region20: #{tpu_custom_call.1} parent=5 // pred_fallthru
        _
      %p202 = scmp.le.s32.totalorder 1, %s13
      %p203 = scmp.lt.s32.totalorder %s13, 5
      %p204 = pnand %p202, %p203
      %p205 = pneg %p204
      // Predicated region
      $region33: #{tpu_custom_call.1} parent=5 // pred_check
        _
      $region34: #{tpu_custom_call.1} parent=5 // pred_check_branch
        %207 = sbr.rel (%p204) target = $region36
      $region35: #{tpu_custom_call.1} parent=5 // pred_region
        %s208 = ssub.s32 %s13, 1
        %p209 = scmp.lt.s32.totalorder %s22, 1
        %s210 = scalar_select %p209, %s22, 1
        %s211 = smul.addr %s210, 4
        %s212 = smul.addr %s211, 4
        %s213 = scalar_lea.vmem %s0, %s212
        %p214 = pneg %p51
        %p215 = pneg %p48
        %s216 = smul.u32 4, %s23
        %p217 = scmp.lt.s32.totalorder %s216, 7
        %s218 = scalar_select %p217, %s216, 7
        %s219 = smul.addr %s218, 4
        %s220 = scalar_lea.vmem %s1, %s219
        %p221 = pneg %p77
        %p222 = pneg %p74
        %p223 = pneg %p98
        %p224 = pneg %p95
        %p225 = scmp.lt.s32.totalorder %s22, 1
        %s226 = scalar_select %p225, %s22, 1
        %p227 = scmp.lt.s32.totalorder %s23, 1
        %s228 = scalar_select %p227, %s23, 1
        %s229 = smul.addr %s226, 2
        %s230 = sadd.s32 %s228, %s229
        %s231 = smul.addr %s230, 8
        %s232 = scalar_lea.vmem %s3, %s231
        %p233 = pneg %p126
        %p234 = pneg %p123
        %p235 = pneg %p152
        %p236 = pneg %p149
        %s237 = sand.u32 %s139, 1
        %s238 = scalar_lea.sflag [#allocation4], %s237
        %s239 = sand.u32 %s139, 1
        %s240 = scalar_lea.vmem [#allocation3], %s239
        %p241 = scmp.lt.s32.totalorder %s22, 1
        %s242 = scalar_select %p241, %s22, 1
        %s243 = smul.addr %s242, 4
        %s244 = smul.addr %s243, 4
        %s245 = scalar_lea.vmem %s0, %s244
        %s246 = smul.u32 4, %s23
        %p247 = scmp.lt.s32.totalorder %s246, 7
        %s248 = scalar_select %p247, %s246, 7
        %s249 = smul.addr %s248, 4
        %s250 = scalar_lea.vmem %s1, %s249
        %s251 = smul.u32 4, %s23
        %p252 = scmp.lt.s32.totalorder %s22, 1
        %s253 = scalar_select %p252, %s22, 1
        %p254 = scmp.lt.s32.totalorder %s23, 1
        %s255 = scalar_select %p254, %s23, 1
        %s256 = smul.addr %s253, 2
        %s257 = sadd.s32 %s255, %s256
        %s258 = smul.addr %s257, 8
        %s259 = scalar_lea.vmem %s3, %s258
        %p261 = scmp.eq.s32.totalorder %s23, 0
        // Predicated region
        $region37: #{tpu_custom_call.1} parent=35 // pred_check
          %p262 = pneg %p261
        $region38: #{tpu_custom_call.1} parent=35 // pred_check_branch
          %264 = sbr.rel (%p262) target = $region40
        $region39: #{tpu_custom_call.1} parent=35 // pred_region
          %vm265 = vcmask 8192
          %266 = vst.msk [vmem:[%s240] sm:$0x1] %vm265, 0.0
          %v267 = vld [vmem:[%s245] sm:$0xf]
          %v268 = vld [vmem:[%s2] sm:$0xf]
          %vm269 = vcmask 64512
          %v271 = vsel %vm269, %v267, 0
          %vm273 = vcmask 1043456
          %v275 = vsel %vm273, %v268, 0
          %277 = vmatprep.subr.bf16.mxu0 0
          %278 = vmatpush1.bf16.msra.mxu0 %v275
          %279 = vmatprep.subr.bf16.mxu0 0
          %280 = vmatpush1.bf16.msra.mxu0 0
          %281 = vmatprep.subr.bf16.mxu0 0
          %282 = vmatpush1.bf16.msra.mxu0 0
          %283 = vmatprep.subr.bf16.mxu0 0
          %284 = vmatpush1.bf16.msra.mxu0 0
          %285 = vmatprep.subr.bf16.mxu0 0
          %286 = vmatpush1.bf16.msra.mxu0 0
          %287 = vmatprep.subr.bf16.mxu0 0
          %288 = vmatpush1.bf16.msra.mxu0 0
          %289 = vmatprep.subr.bf16.mxu0 0
          %290 = vmatpush1.bf16.msra.mxu0 0
          %291 = vmatprep.subr.bf16.mxu0 0
          %292 = vmatpush1.bf16.msra.mxu0 0
          %293 = vmatprep.subr.bf16.mxu0 0
          %294 = vmatpush1.bf16.msra.mxu0 0
          %295 = vmatprep.subr.bf16.mxu0 0
          %296 = vmatpush1.bf16.msra.mxu0 0
          %297 = vmatprep.subr.bf16.mxu0 0
          %298 = vmatpush1.bf16.msra.mxu0 0
          %299 = vmatprep.subr.bf16.mxu0 0
          %300 = vmatpush1.bf16.msra.mxu0 0
          %301 = vmatprep.subr.bf16.mxu0 0
          %302 = vmatpush1.bf16.msra.mxu0 0
          %303 = vmatprep.subr.bf16.mxu0 0
          %304 = vmatpush1.bf16.msra.mxu0 0
          %305 = vmatprep.subr.bf16.mxu0 0
          %306 = vmatpush1.bf16.msra.mxu0 0
          %307 = vmatprep.subr.bf16.mxu0 0
          %308 = vmatpush1.bf16.msra.mxu0 0
          %309 = vmatprep.mubr.bf16.mxu0 0
          %310 = vmatmul.mubr.bf16.gmra.mrb[0].mxu0 %v271
          %v311 = vpop.f32.mrb[0].mxu0
          %v312 = vadd.f32 0.0, %v311
          %v313 = vpop.f32.mrb[0].mxu0
          %v314 = vpop.f32.mrb[0].mxu0
          %v315 = vpop.f32.mrb[0].mxu0
          %316 = vdwg.mxu0
          %v317 = vpack.c.bf16 %v312, %v312
          %vm318 = vcmask 388096
          %319 = vst.msk [vmem:[#allocation2] sm:$0xf] %vm318, %v317
          %s320 = scalar_lea.vmem %s245, 4
          %v321 = vld [vmem:[%s320] sm:$0xf]
          %v322 = vld [vmem:[%s2] sm:$0xf]
          %v324 = vsel %vm269, %v321, 0
          %v327 = vsel %vm273, %v322, 0
          %329 = vmatprep.subr.bf16.mxu0 0
          %330 = vmatpush1.bf16.msra.mxu0 %v327
          %331 = vmatprep.subr.bf16.mxu0 0
          %332 = vmatpush1.bf16.msra.mxu0 0
          %333 = vmatprep.subr.bf16.mxu0 0
          %334 = vmatpush1.bf16.msra.mxu0 0
          %335 = vmatprep.subr.bf16.mxu0 0
          %336 = vmatpush1.bf16.msra.mxu0 0
          %337 = vmatprep.subr.bf16.mxu0 0
          %338 = vmatpush1.bf16.msra.mxu0 0
          %339 = vmatprep.subr.bf16.mxu0 0
          %340 = vmatpush1.bf16.msra.mxu0 0
          %341 = vmatprep.subr.bf16.mxu0 0
          %342 = vmatpush1.bf16.msra.mxu0 0
          %343 = vmatprep.subr.bf16.mxu0 0
          %344 = vmatpush1.bf16.msra.mxu0 0
          %345 = vmatprep.subr.bf16.mxu0 0
          %346 = vmatpush1.bf16.msra.mxu0 0
          %347 = vmatprep.subr.bf16.mxu0 0
          %348 = vmatpush1.bf16.msra.mxu0 0
          %349 = vmatprep.subr.bf16.mxu0 0
          %350 = vmatpush1.bf16.msra.mxu0 0
          %351 = vmatprep.subr.bf16.mxu0 0
          %352 = vmatpush1.bf16.msra.mxu0 0
          %353 = vmatprep.subr.bf16.mxu0 0
          %354 = vmatpush1.bf16.msra.mxu0 0
          %355 = vmatprep.subr.bf16.mxu0 0
          %356 = vmatpush1.bf16.msra.mxu0 0
          %357 = vmatprep.subr.bf16.mxu0 0
          %358 = vmatpush1.bf16.msra.mxu0 0
          %359 = vmatprep.subr.bf16.mxu0 0
          %360 = vmatpush1.bf16.msra.mxu0 0
          %361 = vmatprep.mubr.bf16.mxu0 0
          %362 = vmatmul.mubr.bf16.gmra.mrb[0].mxu0 %v324
          %v363 = vpop.f32.mrb[0].mxu0
          %v364 = vadd.f32 0.0, %v363
          %v365 = vpop.f32.mrb[0].mxu0
          %v366 = vpop.f32.mrb[0].mxu0
          %v367 = vpop.f32.mrb[0].mxu0
          %368 = vdwg.mxu0
          %v369 = vpack.c.bf16 %v364, %v364
          %s370 = scalar_lea.vmem [#allocation2], 4
          %371 = vst.msk [vmem:[%s370] sm:$0xf] %vm318, %v369
          %s372 = scalar_lea.vmem %s245, 8
          %v373 = vld [vmem:[%s372] sm:$0xf]
          %v374 = vld [vmem:[%s2] sm:$0xf]
          %v376 = vsel %vm269, %v373, 0
          %v379 = vsel %vm273, %v374, 0
          %381 = vmatprep.subr.bf16.mxu0 0
          %382 = vmatpush1.bf16.msra.mxu0 %v379
          %383 = vmatprep.subr.bf16.mxu0 0
          %384 = vmatpush1.bf16.msra.mxu0 0
          %385 = vmatprep.subr.bf16.mxu0 0
          %386 = vmatpush1.bf16.msra.mxu0 0
          %387 = vmatprep.subr.bf16.mxu0 0
          %388 = vmatpush1.bf16.msra.mxu0 0
          %389 = vmatprep.subr.bf16.mxu0 0
          %390 = vmatpush1.bf16.msra.mxu0 0
          %391 = vmatprep.subr.bf16.mxu0 0
          %392 = vmatpush1.bf16.msra.mxu0 0
          %393 = vmatprep.subr.bf16.mxu0 0
          %394 = vmatpush1.bf16.msra.mxu0 0
          %395 = vmatprep.subr.bf16.mxu0 0
          %396 = vmatpush1.bf16.msra.mxu0 0
          %397 = vmatprep.subr.bf16.mxu0 0
          %398 = vmatpush1.bf16.msra.mxu0 0
          %399 = vmatprep.subr.bf16.mxu0 0
          %400 = vmatpush1.bf16.msra.mxu0 0
          %401 = vmatprep.subr.bf16.mxu0 0
          %402 = vmatpush1.bf16.msra.mxu0 0
          %403 = vmatprep.subr.bf16.mxu0 0
          %404 = vmatpush1.bf16.msra.mxu0 0
          %405 = vmatprep.subr.bf16.mxu0 0
          %406 = vmatpush1.bf16.msra.mxu0 0
          %407 = vmatprep.subr.bf16.mxu0 0
          %408 = vmatpush1.bf16.msra.mxu0 0
          %409 = vmatprep.subr.bf16.mxu0 0
          %410 = vmatpush1.bf16.msra.mxu0 0
          %411 = vmatprep.subr.bf16.mxu0 0
          %412 = vmatpush1.bf16.msra.mxu0 0
          %413 = vmatprep.mubr.bf16.mxu0 0
          %414 = vmatmul.mubr.bf16.gmra.mrb[0].mxu0 %v376
          %v415 = vpop.f32.mrb[0].mxu0
          %v416 = vadd.f32 0.0, %v415
          %v417 = vpop.f32.mrb[0].mxu0
          %v418 = vpop.f32.mrb[0].mxu0
          %v419 = vpop.f32.mrb[0].mxu0
          %420 = vdwg.mxu0
          %v421 = vpack.c.bf16 %v416, %v416
          %s422 = scalar_lea.vmem [#allocation2], 8
          %423 = vst.msk [vmem:[%s422] sm:$0xf] %vm318, %v421
          %s424 = scalar_lea.vmem %s245, 12
          %v425 = vld [vmem:[%s424] sm:$0xf]
          %v426 = vld [vmem:[%s2] sm:$0xf]
          %v428 = vsel %vm269, %v425, 0
          %v431 = vsel %vm273, %v426, 0
          %433 = vmatprep.subr.bf16.mxu0 0
          %434 = vmatpush1.bf16.msra.mxu0 %v431
          %435 = vmatprep.subr.bf16.mxu0 0
          %436 = vmatpush1.bf16.msra.mxu0 0
          %437 = vmatprep.subr.bf16.mxu0 0
          %438 = vmatpush1.bf16.msra.mxu0 0
          %439 = vmatprep.subr.bf16.mxu0 0
          %440 = vmatpush1.bf16.msra.mxu0 0
          %441 = vmatprep.subr.bf16.mxu0 0
          %442 = vmatpush1.bf16.msra.mxu0 0
          %443 = vmatprep.subr.bf16.mxu0 0
          %444 = vmatpush1.bf16.msra.mxu0 0
          %445 = vmatprep.subr.bf16.mxu0 0
          %446 = vmatpush1.bf16.msra.mxu0 0
          %447 = vmatprep.subr.bf16.mxu0 0
          %448 = vmatpush1.bf16.msra.mxu0 0
          %449 = vmatprep.subr.bf16.mxu0 0
          %450 = vmatpush1.bf16.msra.mxu0 0
          %451 = vmatprep.subr.bf16.mxu0 0
          %452 = vmatpush1.bf16.msra.mxu0 0
          %453 = vmatprep.subr.bf16.mxu0 0
          %454 = vmatpush1.bf16.msra.mxu0 0
          %455 = vmatprep.subr.bf16.mxu0 0
          %456 = vmatpush1.bf16.msra.mxu0 0
          %457 = vmatprep.subr.bf16.mxu0 0
          %458 = vmatpush1.bf16.msra.mxu0 0
          %459 = vmatprep.subr.bf16.mxu0 0
          %460 = vmatpush1.bf16.msra.mxu0 0
          %461 = vmatprep.subr.bf16.mxu0 0
          %462 = vmatpush1.bf16.msra.mxu0 0
          %463 = vmatprep.subr.bf16.mxu0 0
          %464 = vmatpush1.bf16.msra.mxu0 0
          %465 = vmatprep.mubr.bf16.mxu0 0
          %466 = vmatmul.mubr.bf16.gmra.mrb[0].mxu0 %v428
          %v467 = vpop.f32.mrb[0].mxu0
          %v468 = vadd.f32 0.0, %v467
          %v469 = vpop.f32.mrb[0].mxu0
          %v470 = vpop.f32.mrb[0].mxu0
          %v471 = vpop.f32.mrb[0].mxu0
          %472 = vdwg.mxu0
          %v473 = vpack.c.bf16 %v468, %v468
          %s474 = scalar_lea.vmem [#allocation2], 12
          %475 = vst.msk [vmem:[%s474] sm:$0xf] %vm318, %v473
        $region40: #{tpu_custom_call.1} parent=35 // pred_fallthru
          _
        %v476 = vld [vmem:[%s250] sm:$0xf]
        %v477 = vld [vmem:[%s250 + $0x4] sm:$0xf]
        %v478 = vld [vmem:[%s250 + $0x8] sm:$0xf]
        %v479 = vld [vmem:[%s250 + $0xc] sm:$0xf]
        %v480 = vld [vmem:[#allocation2] sm:$0xf]
        %v485 = vunpack.c.l.b16 %v476
        %v486 = vunpack.c.l.b16 %v477
        %v487 = vunpack.c.l.b16 %v478
        %v488 = vunpack.c.l.b16 %v479
        %v489 = vpack.c.b16 %v486, %v485
        %v490 = vpack.c.b16 %v488, %v487
        %vm491 = vcmask 64512
        %v493 = vsel %vm491, %v489, 0
        %v496 = vsel %vm491, %v490, 0
        %vm498 = vcmask 1043456
        %v500 = vsel %vm498, %v480, 0
        %502 = vmatprep.subr.bf16.mxu0 0
        %503 = vmatpush1.bf16.msra.mxu0 %v500
        %504 = vmatprep.subr.bf16.mxu0 0
        %505 = vmatpush1.bf16.msra.mxu0 0
        %506 = vmatprep.subr.bf16.mxu0 0
        %507 = vmatpush1.bf16.msra.mxu0 0
        %508 = vmatprep.subr.bf16.mxu0 0
        %509 = vmatpush1.bf16.msra.mxu0 0
        %510 = vmatprep.subr.bf16.mxu0 0
        %511 = vmatpush1.bf16.msra.mxu0 0
        %512 = vmatprep.subr.bf16.mxu0 0
        %513 = vmatpush1.bf16.msra.mxu0 0
        %514 = vmatprep.subr.bf16.mxu0 0
        %515 = vmatpush1.bf16.msra.mxu0 0
        %516 = vmatprep.subr.bf16.mxu0 0
        %517 = vmatpush1.bf16.msra.mxu0 0
        %518 = vmatprep.subr.bf16.mxu0 0
        %519 = vmatpush1.bf16.msra.mxu0 0
        %520 = vmatprep.subr.bf16.mxu0 0
        %521 = vmatpush1.bf16.msra.mxu0 0
        %522 = vmatprep.subr.bf16.mxu0 0
        %523 = vmatpush1.bf16.msra.mxu0 0
        %524 = vmatprep.subr.bf16.mxu0 0
        %525 = vmatpush1.bf16.msra.mxu0 0
        %526 = vmatprep.subr.bf16.mxu0 0
        %527 = vmatpush1.bf16.msra.mxu0 0
        %528 = vmatprep.subr.bf16.mxu0 0
        %529 = vmatpush1.bf16.msra.mxu0 0
        %530 = vmatprep.subr.bf16.mxu0 0
        %531 = vmatpush1.bf16.msra.mxu0 0
        %532 = vmatprep.subr.bf16.mxu0 0
        %533 = vmatpush1.bf16.msra.mxu0 0
        %534 = vmatprep.mubr.bf16.mxu0 0
        %535 = vmatmul.mubr.bf16.gmra.mrb[0].mxu0 %v493
        %v536 = vpop.f32.mrb[0].mxu0
        %v537 = vadd.f32 0.0, %v536
        %v538 = vpop.f32.mrb[0].mxu0
        %v539 = vpop.f32.mrb[0].mxu0
        %v540 = vadd.f32 0.0, %v539
        %v541 = vpop.f32.mrb[0].mxu0
        %542 = vmatprep.mubr.bf16.mxu0 0
        %543 = vmatmul.mubr.bf16.gmra.mrb[0].mxu0 %v496
        %v544 = vpop.f32.mrb[0].mxu0
        %v545 = vadd.f32 0.0, %v544
        %v546 = vpop.f32.mrb[0].mxu0
        %v547 = vpop.f32.mrb[0].mxu0
        %v548 = vadd.f32 0.0, %v547
        %v549 = vpop.f32.mrb[0].mxu0
        %550 = vdwg.mxu0
        %s551 = scalar_lea.vmem [#allocation2], 4
        %v552 = vld [vmem:[%s551] sm:$0xf]
        %v554 = vsel %vm498, %v552, 0
        %556 = vmatprep.subr.bf16.mxu0 0
        %557 = vmatpush1.bf16.msra.mxu0 %v554
        %558 = vmatprep.subr.bf16.mxu0 0
        %559 = vmatpush1.bf16.msra.mxu0 0
        %560 = vmatprep.subr.bf16.mxu0 0
        %561 = vmatpush1.bf16.msra.mxu0 0
        %562 = vmatprep.subr.bf16.mxu0 0
        %563 = vmatpush1.bf16.msra.mxu0 0
        %564 = vmatprep.subr.bf16.mxu0 0
        %565 = vmatpush1.bf16.msra.mxu0 0
        %566 = vmatprep.subr.bf16.mxu0 0
        %567 = vmatpush1.bf16.msra.mxu0 0
        %568 = vmatprep.subr.bf16.mxu0 0
        %569 = vmatpush1.bf16.msra.mxu0 0
        %570 = vmatprep.subr.bf16.mxu0 0
        %571 = vmatpush1.bf16.msra.mxu0 0
        %572 = vmatprep.subr.bf16.mxu0 0
        %573 = vmatpush1.bf16.msra.mxu0 0
        %574 = vmatprep.subr.bf16.mxu0 0
        %575 = vmatpush1.bf16.msra.mxu0 0
        %576 = vmatprep.subr.bf16.mxu0 0
        %577 = vmatpush1.bf16.msra.mxu0 0
        %578 = vmatprep.subr.bf16.mxu0 0
        %579 = vmatpush1.bf16.msra.mxu0 0
        %580 = vmatprep.subr.bf16.mxu0 0
        %581 = vmatpush1.bf16.msra.mxu0 0
        %582 = vmatprep.subr.bf16.mxu0 0
        %583 = vmatpush1.bf16.msra.mxu0 0
        %584 = vmatprep.subr.bf16.mxu0 0
        %585 = vmatpush1.bf16.msra.mxu0 0
        %586 = vmatprep.subr.bf16.mxu0 0
        %587 = vmatpush1.bf16.msra.mxu0 0
        %588 = vmatprep.mubr.bf16.mxu0 0
        %589 = vmatmul.mubr.bf16.gmra.mrb[0].mxu0 %v493
        %v590 = vpop.f32.mrb[0].mxu0
        %v591 = vadd.f32 0.0, %v590
        %v592 = vpop.f32.mrb[0].mxu0
        %v593 = vpop.f32.mrb[0].mxu0
        %v594 = vadd.f32 0.0, %v593
        %v595 = vpop.f32.mrb[0].mxu0
        %596 = vmatprep.mubr.bf16.mxu0 0
        %597 = vmatmul.mubr.bf16.gmra.mrb[0].mxu0 %v496
        %v598 = vpop.f32.mrb[0].mxu0
        %v599 = vadd.f32 0.0, %v598
        %v600 = vpop.f32.mrb[0].mxu0
        %v601 = vpop.f32.mrb[0].mxu0
        %v602 = vadd.f32 0.0, %v601
        %v603 = vpop.f32.mrb[0].mxu0
        %604 = vdwg.mxu0
        %s605 = scalar_lea.vmem [#allocation2], 8
        %v606 = vld [vmem:[%s605] sm:$0xf]
        %v608 = vsel %vm498, %v606, 0
        %610 = vmatprep.subr.bf16.mxu0 0
        %611 = vmatpush1.bf16.msra.mxu0 %v608
        %612 = vmatprep.subr.bf16.mxu0 0
        %613 = vmatpush1.bf16.msra.mxu0 0
        %614 = vmatprep.subr.bf16.mxu0 0
        %615 = vmatpush1.bf16.msra.mxu0 0
        %616 = vmatprep.subr.bf16.mxu0 0
        %617 = vmatpush1.bf16.msra.mxu0 0
        %618 = vmatprep.subr.bf16.mxu0 0
        %619 = vmatpush1.bf16.msra.mxu0 0
        %620 = vmatprep.subr.bf16.mxu0 0
        %621 = vmatpush1.bf16.msra.mxu0 0
        %622 = vmatprep.subr.bf16.mxu0 0
        %623 = vmatpush1.bf16.msra.mxu0 0
        %624 = vmatprep.subr.bf16.mxu0 0
        %625 = vmatpush1.bf16.msra.mxu0 0
        %626 = vmatprep.subr.bf16.mxu0 0
        %627 = vmatpush1.bf16.msra.mxu0 0
        %628 = vmatprep.subr.bf16.mxu0 0
        %629 = vmatpush1.bf16.msra.mxu0 0
        %630 = vmatprep.subr.bf16.mxu0 0
        %631 = vmatpush1.bf16.msra.mxu0 0
        %632 = vmatprep.subr.bf16.mxu0 0
        %633 = vmatpush1.bf16.msra.mxu0 0
        %634 = vmatprep.subr.bf16.mxu0 0
        %635 = vmatpush1.bf16.msra.mxu0 0
        %636 = vmatprep.subr.bf16.mxu0 0
        %637 = vmatpush1.bf16.msra.mxu0 0
        %638 = vmatprep.subr.bf16.mxu0 0
        %639 = vmatpush1.bf16.msra.mxu0 0
        %640 = vmatprep.subr.bf16.mxu0 0
        %641 = vmatpush1.bf16.msra.mxu0 0
        %642 = vmatprep.mubr.bf16.mxu0 0
        %643 = vmatmul.mubr.bf16.gmra.mrb[0].mxu0 %v493
        %v644 = vpop.f32.mrb[0].mxu0
        %v645 = vadd.f32 0.0, %v644
        %v646 = vpop.f32.mrb[0].mxu0
        %v647 = vpop.f32.mrb[0].mxu0
        %v648 = vadd.f32 0.0, %v647
        %v649 = vpop.f32.mrb[0].mxu0
        %650 = vmatprep.mubr.bf16.mxu0 0
        %651 = vmatmul.mubr.bf16.gmra.mrb[0].mxu0 %v496
        %v652 = vpop.f32.mrb[0].mxu0
        %v653 = vadd.f32 0.0, %v652
        %v654 = vpop.f32.mrb[0].mxu0
        %v655 = vpop.f32.mrb[0].mxu0
        %v656 = vadd.f32 0.0, %v655
        %v657 = vpop.f32.mrb[0].mxu0
        %658 = vdwg.mxu0
        %s659 = scalar_lea.vmem [#allocation2], 12
        %v660 = vld [vmem:[%s659] sm:$0xf]
        %v662 = vsel %vm498, %v660, 0
        %664 = vmatprep.subr.bf16.mxu0 0
        %665 = vmatpush1.bf16.msra.mxu0 %v662
        %666 = vmatprep.subr.bf16.mxu0 0
        %667 = vmatpush1.bf16.msra.mxu0 0
        %668 = vmatprep.subr.bf16.mxu0 0
        %669 = vmatpush1.bf16.msra.mxu0 0
        %670 = vmatprep.subr.bf16.mxu0 0
        %671 = vmatpush1.bf16.msra.mxu0 0
        %672 = vmatprep.subr.bf16.mxu0 0
        %673 = vmatpush1.bf16.msra.mxu0 0
        %674 = vmatprep.subr.bf16.mxu0 0
        %675 = vmatpush1.bf16.msra.mxu0 0
        %676 = vmatprep.subr.bf16.mxu0 0
        %677 = vmatpush1.bf16.msra.mxu0 0
        %678 = vmatprep.subr.bf16.mxu0 0
        %679 = vmatpush1.bf16.msra.mxu0 0
        %680 = vmatprep.subr.bf16.mxu0 0
        %681 = vmatpush1.bf16.msra.mxu0 0
        %682 = vmatprep.subr.bf16.mxu0 0
        %683 = vmatpush1.bf16.msra.mxu0 0
        %684 = vmatprep.subr.bf16.mxu0 0
        %685 = vmatpush1.bf16.msra.mxu0 0
        %686 = vmatprep.subr.bf16.mxu0 0
        %687 = vmatpush1.bf16.msra.mxu0 0
        %688 = vmatprep.subr.bf16.mxu0 0
        %689 = vmatpush1.bf16.msra.mxu0 0
        %690 = vmatprep.subr.bf16.mxu0 0
        %691 = vmatpush1.bf16.msra.mxu0 0
        %692 = vmatprep.subr.bf16.mxu0 0
        %693 = vmatpush1.bf16.msra.mxu0 0
        %694 = vmatprep.subr.bf16.mxu0 0
        %695 = vmatpush1.bf16.msra.mxu0 0
        %696 = vmatprep.mubr.bf16.mxu0 0
        %697 = vmatmul.mubr.bf16.gmra.mrb[0].mxu0 %v493
        %v698 = vpop.f32.mrb[0].mxu0
        %v699 = vadd.f32 0.0, %v698
        %v700 = vpop.f32.mrb[0].mxu0
        %v701 = vpop.f32.mrb[0].mxu0
        %v702 = vadd.f32 0.0, %v701
        %v703 = vpop.f32.mrb[0].mxu0
        %704 = vmatprep.mubr.bf16.mxu0 0
        %705 = vmatmul.mubr.bf16.gmra.mrb[0].mxu0 %v496
        %v706 = vpop.f32.mrb[0].mxu0
        %v707 = vadd.f32 0.0, %v706
        %v708 = vpop.f32.mrb[0].mxu0
        %v709 = vpop.f32.mrb[0].mxu0
        %v710 = vadd.f32 0.0, %v709
        %v711 = vpop.f32.mrb[0].mxu0
        %712 = vdwg.mxu0
        %v713 = vld [vmem:[%s259] sm:$0xff]
        %v714 = vunpack.c.0.s8 %v713
        %v715 = vunpack.c.1.s8 %v713
        %v716 = vunpack.c.2.s8 %v713
        %v717 = vunpack.c.3.s8 %v713
        %vm718 = vcmp.ge.s32.totalorder %v714, 0
        %vm719 = vcmp.ge.s32.totalorder %v715, 0
        %vm720 = vcmp.ge.s32.totalorder %v716, 0
        %vm721 = vcmp.ge.s32.totalorder %v717, 0
        %v722 = vmax.f32 %v537, %v591
        %v723 = vmax.f32 %v540, %v594
        %v724 = vmax.f32 %v545, %v599
        %v725 = vmax.f32 %v548, %v602
        %v726 = vmax.f32 %v722, %v645
        %v727 = vmax.f32 %v723, %v648
        %v728 = vmax.f32 %v724, %v653
        %v729 = vmax.f32 %v725, %v656
        %v730 = vmax.f32 %v726, %v699
        %v731 = vmax.f32 %v727, %v702
        %v732 = vmax.f32 %v728, %v707
        %v733 = vmax.f32 %v729, %v710
        %v734 = vsub.f32 %v537, %v730
        %v735 = vsub.f32 %v540, %v731
        %v736 = vsub.f32 %v545, %v732
        %v737 = vsub.f32 %v548, %v733
        %v738 = vmul.f32 %v734, 1.442695
        %v739 = vpow.pop %v738
        %v740 = vmul.f32 %v735, 1.442695
        %v741 = vpow.pop %v740
        %v742 = vmul.f32 %v736, 1.442695
        %v743 = vpow.pop %v742
        %v744 = vmul.f32 %v737, 1.442695
        %v745 = vpow.pop %v744
        %v746 = vadd.f32 %v739, 0.0
        %v747 = vadd.f32 %v741, 0.0
        %v748 = vadd.f32 %v743, 0.0
        %v749 = vadd.f32 %v745, 0.0
        %vm750 = vcmp.eq.s32.totalorder %v714, 0
        %vm751 = vcmp.eq.s32.totalorder %v715, 0
        %vm752 = vcmp.eq.s32.totalorder %v716, 0
        %vm753 = vcmp.eq.s32.totalorder %v717, 0
        %v754 = vsel %vm750, %v537, 0.0
        %v755 = vsel %vm751, %v540, 0.0
        %v756 = vsel %vm752, %v545, 0.0
        %v757 = vsel %vm753, %v548, 0.0
        %v758 = vadd.f32 %v754, 0.0
        %v759 = vadd.f32 %v755, 0.0
        %v760 = vadd.f32 %v756, 0.0
        %v761 = vadd.f32 %v757, 0.0
        %v762 = vsub.f32 %v591, %v730
        %v763 = vsub.f32 %v594, %v731
        %v764 = vsub.f32 %v599, %v732
        %v765 = vsub.f32 %v602, %v733
        %v766 = vmul.f32 %v762, 1.442695
        %v767 = vpow.pop %v766
        %v768 = vmul.f32 %v763, 1.442695
        %v769 = vpow.pop %v768
        %v770 = vmul.f32 %v764, 1.442695
        %v771 = vpow.pop %v770
        %v772 = vmul.f32 %v765, 1.442695
        %v773 = vpow.pop %v772
        %v774 = vadd.f32 %v746, %v767
        %v775 = vadd.f32 %v747, %v769
        %v776 = vadd.f32 %v748, %v771
        %v777 = vadd.f32 %v749, %v773
        %vm778 = vcmp.eq.s32.totalorder %v714, 1
        %vm779 = vcmp.eq.s32.totalorder %v715, 1
        %vm780 = vcmp.eq.s32.totalorder %v716, 1
        %vm781 = vcmp.eq.s32.totalorder %v717, 1
        %v782 = vsel %vm778, %v591, 0.0
        %v783 = vsel %vm779, %v594, 0.0
        %v784 = vsel %vm780, %v599, 0.0
        %v785 = vsel %vm781, %v602, 0.0
        %v786 = vadd.f32 %v758, %v782
        %v787 = vadd.f32 %v759, %v783
        %v788 = vadd.f32 %v760, %v784
        %v789 = vadd.f32 %v761, %v785
        %v790 = vsub.f32 %v645, %v730
        %v791 = vsub.f32 %v648, %v731
        %v792 = vsub.f32 %v653, %v732
        %v793 = vsub.f32 %v656, %v733
        %v794 = vmul.f32 %v790, 1.442695
        %v795 = vpow.pop %v794
        %v796 = vmul.f32 %v791, 1.442695
        %v797 = vpow.pop %v796
        %v798 = vmul.f32 %v792, 1.442695
        %v799 = vpow.pop %v798
        %v800 = vmul.f32 %v793, 1.442695
        %v801 = vpow.pop %v800
        %v802 = vadd.f32 %v774, %v795
        %v803 = vadd.f32 %v775, %v797
        %v804 = vadd.f32 %v776, %v799
        %v805 = vadd.f32 %v777, %v801
        %vm806 = vcmp.eq.s32.totalorder %v714, 2
        %vm807 = vcmp.eq.s32.totalorder %v715, 2
        %vm808 = vcmp.eq.s32.totalorder %v716, 2
        %vm809 = vcmp.eq.s32.totalorder %v717, 2
        %v810 = vsel %vm806, %v645, 0.0
        %v811 = vsel %vm807, %v648, 0.0
        %v812 = vsel %vm808, %v653, 0.0
        %v813 = vsel %vm809, %v656, 0.0
        %v814 = vadd.f32 %v786, %v810
        %v815 = vadd.f32 %v787, %v811
        %v816 = vadd.f32 %v788, %v812
        %v817 = vadd.f32 %v789, %v813
        %v818 = vsub.f32 %v699, %v730
        %v819 = vsub.f32 %v702, %v731
        %v820 = vsub.f32 %v707, %v732
        %v821 = vsub.f32 %v710, %v733
        %v822 = vmul.f32 %v818, 1.442695
        %v823 = vpow.pop %v822
        %v824 = vmul.f32 %v819, 1.442695
        %v825 = vpow.pop %v824
        %v826 = vmul.f32 %v820, 1.442695
        %v827 = vpow.pop %v826
        %v828 = vmul.f32 %v821, 1.442695
        %v829 = vpow.pop %v828
        %v830 = vadd.f32 %v802, %v823
        %v831 = vadd.f32 %v803, %v825
        %v832 = vadd.f32 %v804, %v827
        %v833 = vadd.f32 %v805, %v829
        %vm834 = vcmp.eq.s32.totalorder %v714, 3
        %vm835 = vcmp.eq.s32.totalorder %v715, 3
        %vm836 = vcmp.eq.s32.totalorder %v716, 3
        %vm837 = vcmp.eq.s32.totalorder %v717, 3
        %v838 = vsel %vm834, %v699, 0.0
        %v839 = vsel %vm835, %v702, 0.0
        %v840 = vsel %vm836, %v707, 0.0
        %v841 = vsel %vm837, %v710, 0.0
        %v842 = vadd.f32 %v814, %v838
        %v843 = vadd.f32 %v815, %v839
        %v844 = vadd.f32 %v816, %v840
        %v845 = vadd.f32 %v817, %v841
        %v846 = vlog2.pop %v830
        %v847 = vmul.f32 %v846, 0.6931472
        %v848 = vlog2.pop %v831
        %v849 = vmul.f32 %v848, 0.6931472
        %v850 = vlog2.pop %v832
        %v851 = vmul.f32 %v850, 0.6931472
        %v852 = vlog2.pop %v833
        %v853 = vmul.f32 %v852, 0.6931472
        %v854 = vadd.f32 %v730, %v847
        %v855 = vadd.f32 %v731, %v849
        %v856 = vadd.f32 %v732, %v851
        %v857 = vadd.f32 %v733, %v853
        %v858 = vsub.f32 %v854, %v842
        %v859 = vsub.f32 %v855, %v843
        %v860 = vsub.f32 %v856, %v844
        %v861 = vsub.f32 %v857, %v845
        %v862 = vsel %vm718, %v858, 0.0
        %v863 = vsel %vm719, %v859, 0.0
        %v864 = vsel %vm720, %v860, 0.0
        %v865 = vsel %vm721, %v861, 0.0
        %vm866 = vcmask 392192
        %v867 = vsel %vm866, %v862, 0.0
        %v868 = vsel %vm866, %v863, 0.0
        %v869 = vadd.f32 %v867, %v868
        %v870 = vsel %vm866, %v864, 0.0
        %v871 = vadd.f32 %v869, %v870
        %v872 = vsel %vm866, %v865, 0.0
        %v873 = vadd.f32 %v871, %v872
        %874 = vadd.xlane.f32.xlu0 %v873
        %v875 = vpop.xlane.xlu0 %874
        %v876 = vrot.slane %v875, 4
        %v877 = vadd.f32 %v875, %v876
        %v878 = vrot.slane %v877, 2
        %v879 = vadd.f32 %v877, %v878
        %v880 = vrot.slane %v879, 1
        %v881 = vadd.f32 %v879, %v880
        %s882 = vtos %v881
        %v883 = vsel %vm718, 1, 0
        %v884 = vsel %vm719, 1, 0
        %v885 = vsel %vm720, 1, 0
        %v886 = vsel %vm721, 1, 0
        %v887 = vcvt.s32.f32 %v883
        %v888 = vcvt.s32.f32 %v884
        %v889 = vcvt.s32.f32 %v885
        %v890 = vcvt.s32.f32 %v886
        %v891 = vsel %vm866, %v887, 0.0
        %v892 = vsel %vm866, %v888, 0.0
        %v893 = vadd.f32 %v891, %v892
        %v894 = vsel %vm866, %v889, 0.0
        %v895 = vadd.f32 %v893, %v894
        %v896 = vsel %vm866, %v890, 0.0
        %v897 = vadd.f32 %v895, %v896
        %898 = vadd.xlane.f32.xlu0 %v897
        %v899 = vpop.xlane.xlu0 %898
        %v900 = vrot.slane %v899, 4
        %v901 = vadd.f32 %v899, %v900
        %v902 = vrot.slane %v901, 2
        %v903 = vadd.f32 %v901, %v902
        %v904 = vrot.slane %v903, 1
        %v905 = vadd.f32 %v903, %v904
        %s906 = vtos %v905
        %v907 = vlaneseq
        %v908 = vand.u32 %v907, 127
        %v909 = vld [vmem:[%s240] sm:$0x1]
        %vm910 = vcmp.eq.s32.totalorder %v908, 0
        %v911 = vstv %s882
        %v912 = vstv %s906
        %v913 = vsel %vm910, %v911, %v912
        %v914 = vadd.f32 %v909, %v913
        %vm915 = vcmask 8192
        %916 = vst.msk [vmem:[%s240] sm:$0x1] %vm915, %v914
        %s917 = sand.u32 %s139, 1
        %s918 = scalar_lea.sflag [#allocation4], %s917
        %s919 = sand.u32 %s139, 1
        %s920 = scalar_lea.vmem [#allocation3], %s919
        // Predicated region
        $region41: #{tpu_custom_call.1} parent=35 // pred_check
          %p921 = pneg %p149
        $region42: #{tpu_custom_call.1} parent=35 // pred_check_branch
          %923 = sbr.rel (%p921) target = $region44
        $region43: #{tpu_custom_call.1} parent=35 // pred_region
          %s925 = ssub.s32 16, 16
          %926 = vsyncadd %s918, %s925
          %s927 = smul.addr %s22, 16
          %s928 = scalar_lea.hbm %s4, %s927
          %s930 = sshll.u32 %s920, 4
          %s931 = int_to_ptr.vmem [resolvable:$true] %s930
          %933 = dma.vmem_to_hbm [thread:$0]  %s931, 16, %s928, %s918
        $region44: #{tpu_custom_call.1} parent=35 // pred_fallthru
          _
      $region36: #{tpu_custom_call.1} parent=5 // pred_fallthru
        _
      %p934 = scmp.le.s32.totalorder 2, %s13
      // Predicated region
      $region45: #{tpu_custom_call.1} parent=5 // pred_check
        %p935 = pneg %p934
      $region46: #{tpu_custom_call.1} parent=5 // pred_check_branch
        %937 = sbr.rel (%p935) target = $region48
      $region47: #{tpu_custom_call.1} parent=5 // pred_region
        %s938 = ssub.s32 %s13, 2
        // Predicated region
        $region49: #{tpu_custom_call.1} parent=47 // pred_check
          %p939 = pneg %p155
        $region50: #{tpu_custom_call.1} parent=47 // pred_check_branch
          %941 = sbr.rel (%p939) target = $region52
        $region51: #{tpu_custom_call.1} parent=47 // pred_region
          %s942 = sand.u32 %s140, 1
          %s943 = scalar_lea.sflag [#allocation4], %s942
          %s944 = sand.u32 %s140, 1
          %s945 = scalar_lea.vmem [#allocation3], %s944
          %946 = dma.done %s943, 16
        $region52: #{tpu_custom_call.1} parent=47 // pred_fallthru
          _
      $region48: #{tpu_custom_call.1} parent=5 // pred_fallthru
        _
    $region6: #{tpu_custom_call.1} parent=1 // loop_footer
      %s17 = sadd.s32 1, %s13
    $region7: #{tpu_custom_call.1} parent=1 // loop_footer_branch
      %12 = sbr.rel target = $region3
    $region8: #{tpu_custom_call.1} parent=1 // loop_exit
      _
    %947 = vsyncpa [#allocation4], 1
    %s948 = scalar_lea.sflag [#allocation4], 1
    %949 = vsyncpa %s948, 1

</llo_original>
